<compile_context>
chip_gen: v6e
topology: v6e:2x2x1
jax: 0.10.0
libtpu: 0.0.40
codegen_flags: <defaults>
</compile_context>

<pallas_src>
import functools

import jax
import jax.numpy as jnp
from jax import lax
from jax.experimental import pallas as pl
from jax.experimental.pallas import tpu as pltpu

_LANE = 128
_MAX_BLOCK_ROWS = 8192      # (8192, 128) f32 tile = 4 MiB per input per pipeline buffer
_NUM_CORE_SPLITS = 2        # leading "parallel" grid axis -> both TensorCores on v7x


def _sublane(dtype):
    """Minimum second-minor tile: 8 (4-byte), 16 (2-byte), 32 (1-byte) dtypes."""
    return max(8, 8 * (4 // jnp.dtype(dtype).itemsize))


def _partial_sums_jnp(x, t):
    """f32 [sum(t*(log x - log(1-x)) + log(1-x)), sum(x*t), sum(x), sum(t)] (plain jnp)."""
    x = x.astype(jnp.float32)
    t = t.astype(jnp.float32)
    log_x = jnp.maximum(jnp.log(x), -100.0)          # PyTorch BCELoss log clamp
    log_1mx = jnp.maximum(jnp.log(1.0 - x), -100.0)
    bce_pos = jnp.sum(t * (log_x - log_1mx) + log_1mx)
    return jnp.stack([bce_pos, jnp.sum(x * t), jnp.sum(x), jnp.sum(t)])


def _dice_bce_partials_kernel(total_rows, needs_mask,
                              x_ref, t_ref, out_ref,
                              bce_acc, inter_acc, x_acc, t_acc):
    """One (core, step) grid step: accumulate the four reduction partials.

    x_ref / t_ref : VMEM (block_rows, 128) tiles of predictions / targets
    out_ref       : VMEM (1, 4, 8, 128) per-core partial-sum vectors
    *_acc         : VMEM (8, 128) f32 running accumulators (persist across steps)
    """
    c = pl.program_id(0)
    s = pl.program_id(1)
    n_steps = pl.num_programs(1)
    block_rows = x_ref.shape[0]

    @pl.when(s == 0)
    def _():
        bce_acc[...] = jnp.zeros_like(bce_acc)
        inter_acc[...] = jnp.zeros_like(inter_acc)
        x_acc[...] = jnp.zeros_like(x_acc)
        t_acc[...] = jnp.zeros_like(t_acc)

    g = block_rows // 8  # block_rows is always a multiple of the sublane tile (>= 8)

    def fold(v):
        # Fold (block_rows, 128) into an (8, 128) vreg with pure VPU adds; the single
        # cross-lane (XLU) reduce happens once per core, in the wrapper epilogue.
        return jnp.sum(v.reshape(g, 8, _LANE), axis=0)

    def accumulate(x, t):
        # BCE refactor: t*log(x) + (1-t)*log(1-x) == t*(log x - log(1-x)) + log(1-x).
        # The -100 clamp matches PyTorch BCELoss and makes zero-masked rows contribute 0.
        log_x = jnp.maximum(jnp.log(x), -100.0)
        log_1mx = jnp.maximum(jnp.log(1.0 - x), -100.0)
        bce_pos = t * (log_x - log_1mx) + log_1mx
        bce_acc[...] += fold(bce_pos)
        inter_acc[...] += fold(x * t)
        x_acc[...] += fold(x)
        t_acc[...] += fold(t)

    # Cast in-kernel so bf16/f16 inputs only move half the HBM bytes.
    x = x_ref[...].astype(jnp.float32)
    t = t_ref[...].astype(jnp.float32)

    if needs_mask:
        blk = c * n_steps + s                 # logical block index
        start = blk * block_rows
        is_full = start + block_rows <= total_rows
        is_partial = jnp.logical_and(start < total_rows, jnp.logical_not(is_full))
        # Clamped duplicate blocks (start >= total_rows) skip compute entirely.

        @pl.when(is_full)
        def _():
            accumulate(x, t)                  # fast path: no iota / selects

        @pl.when(is_partial)
        def _():
            # Mask BOTH x and t BEFORE the logs so out-of-range rows contribute exactly 0
            # (masked x=0 -> log clamped, masked t=0 -> zero product; no NaN leakage).
            row_ids = lax.broadcasted_iota(jnp.int32, x.shape, 0) + start
            valid = row_ids < total_rows
            accumulate(jnp.where(valid, x, 0.0), jnp.where(valid, t, 0.0))
    else:
        accumulate(x, t)

    @pl.when(s == n_steps - 1)
    def _():
        out_ref[0, 0] = bce_acc[...]
        out_ref[0, 1] = inter_acc[...]
        out_ref[0, 2] = x_acc[...]
        out_ref[0, 3] = t_acc[...]


def _combine(sums, n, weight, reduction, epsilon):
    """Tiny scalar epilogue: negate the BCE sum, apply weight/reduction, Dice ratio."""
    bce_sum, inter, sum_x, sum_t = sums[0], sums[1], sums[2], sums[3]
    # TODO(synk): PyTorch BCELoss `weight` may be a per-element/broadcastable tensor;
    # only the scalar-weight case (as used by this module) is implemented here.
    w = jnp.float32(weight)
    if reduction == "mean":
        bce = -(w * bce_sum) / jnp.float32(n)
    elif reduction == "sum":
        bce = -(w * bce_sum)
    else:
        # TODO(synk): reduction='none' needs a per-element output map, not this reduction kernel.
        raise NotImplementedError(f"reduction={reduction!r} not supported")
    eps = jnp.float32(epsilon)
    dice = (2.0 * inter + eps) / (sum_x + sum_t + eps)
    return bce + (1.0 - dice)


def dice_bce_loss(inputs, targets, *, weight=1.0, reduction="mean", epsilon=1.0):
    """Pallas implementation of DiceBCELoss.forward (BCE reduction='mean', scalar weight)."""
    x = inputs.reshape(-1)
    t = targets.reshape(-1)
    n = x.shape[0]

    # Align the kernel's bulk to (sublane * 128) elements; the tiny remainder is handled
    # with plain jnp ops (no full-array pad / copy in the aligned common case).
    sub = max(_sublane(x.dtype), _sublane(t.dtype))
    chunk = sub * _LANE
    bulk_n = (n // chunk) * chunk
    tail_n = n - bulk_n

    if bulk_n == 0:
        # Degenerate tiny input: pure jnp path.
        return _combine(_partial_sums_jnp(x, t), n, weight, reduction, epsilon)

    rows = bulk_n // _LANE
    x2 = x[:bulk_n].reshape(rows, _LANE)   # full-array slice simplifies to a no-op when tail_n == 0
    t2 = t[:bulk_n].reshape(rows, _LANE)

    block_rows = min(_MAX_BLOCK_ROWS, rows)          # always a multiple of `sub`
    blocks_total = pl.cdiv(rows, block_rows)

    # Only split across cores when it can't introduce meaningful duplicated-block overhead
    # (the split only pays off on v7x's two TensorCores anyway).
    if blocks_total >= 2 and (blocks_total % _NUM_CORE_SPLITS == 0
                              or blocks_total >= 4 * _NUM_CORE_SPLITS):
        splits = _NUM_CORE_SPLITS
    else:
        splits = 1
    steps = pl.cdiv(blocks_total, splits)
    needs_mask = (splits * steps * block_rows) != rows

    def in_index_map(c, s):
        # Clamp so a trailing logically-out-of-range block re-reads the last real block
        # instead of issuing an OOB DMA; the kernel skips its compute entirely.
        return (jnp.minimum(c * steps + s, blocks_total - 1), 0)

    kernel = functools.partial(_dice_bce_partials_kernel, rows, needs_mask)

    itembytes = x2.dtype.itemsize + t2.dtype.itemsize
    # 2 pipeline buffers per input + small scratch + headroom; cap below v7x's 64 MiB VMEM.
    vmem_limit = int(min(48 << 20, 2 * block_rows * _LANE * itembytes + (8 << 20)))

    partials = pl.pallas_call(
        kernel,
        out_shape=jax.ShapeDtypeStruct((splits, 4, 8, _LANE), jnp.float32),
        grid=(splits, steps),
        in_specs=[
            pl.BlockSpec((block_rows, _LANE), in_index_map),
            pl.BlockSpec((block_rows, _LANE), in_index_map),
        ],
        out_specs=pl.BlockSpec((1, 4, 8, _LANE), lambda c, s: (c, 0, 0, 0)),
        scratch_shapes=[pltpu.VMEM((8, _LANE), jnp.float32) for _ in range(4)],
        compiler_params=pltpu.CompilerParams(
            dimension_semantics=("parallel", "arbitrary"),
            vmem_limit_bytes=vmem_limit),
        cost_estimate=pl.CostEstimate(
            flops=10 * bulk_n,
            transcendentals=2 * bulk_n,
            bytes_accessed=bulk_n * itembytes + splits * 4 * 8 * _LANE * 4),
    )(x2, t2)

    sums = jnp.sum(partials, axis=(0, 2, 3))          # (4,) cross-core + cross-lane reduce
    if tail_n:
        sums = sums + _partial_sums_jnp(x[bulk_n:], t[bulk_n:])
    return _combine(sums, n, weight, reduction, epsilon)


def _reference(inputs, targets, weight=1.0, epsilon=1.0):
    x = inputs.reshape(-1).astype(jnp.float32)
    t = targets.reshape(-1).astype(jnp.float32)
    log_x = jnp.maximum(jnp.log(x), -100.0)
    log_1mx = jnp.maximum(jnp.log(1.0 - x), -100.0)
    bce = jnp.mean(weight * -(t * log_x + (1.0 - t) * log_1mx))
    inter = jnp.sum(x * t)
    dice = (2.0 * inter + epsilon) / (jnp.sum(x) + jnp.sum(t) + epsilon)
    return bce + (1.0 - dice)


if __name__ == "__main__":
    key = jax.random.PRNGKey(0)
    k1, k2 = jax.random.split(key)

    # NCHW-shaped probabilities / binary targets, like a segmentation head output.
    shape = (2, 4, 16, 16)
    inputs = jax.random.uniform(k1, shape, dtype=jnp.float32,
                                minval=1e-4, maxval=1.0 - 1e-4)
    targets = (jax.random.uniform(k2, shape) > 0.5).astype(jnp.float32)

    weight = 0.7
    epsilon = 1.0

    loss_fn = jax.jit(functools.partial(dice_bce_loss, weight=weight, epsilon=epsilon))
    loss = jax.block_until_ready(loss_fn(inputs, targets))

    ref = _reference(inputs, targets, weight=weight, epsilon=epsilon)
    assert jnp.allclose(loss, ref, rtol=1e-5, atol=1e-5), (loss, ref)

    print("KERNEL_OK")
</pallas_src>

<mosaic_0001>
module attributes {stable_mosaic.version = 11 : i64} {
  func.func @_dice_bce_partials_kernel(%arg0: i32, %arg1: i32, %arg2: memref<16x128xf32, #tpu.memory_space<vmem>>, %arg3: memref<16x128xf32, #tpu.memory_space<vmem>>, %arg4: memref<1x4x8x128xf32, #tpu.memory_space<vmem>>, %arg5: memref<8x128xf32, #tpu.memory_space<vmem>>, %arg6: memref<8x128xf32, #tpu.memory_space<vmem>>, %arg7: memref<8x128xf32, #tpu.memory_space<vmem>>, %arg8: memref<8x128xf32, #tpu.memory_space<vmem>>) attributes {dimension_semantics = [#tpu.dimension_semantics<parallel>, #tpu.dimension_semantics<arbitrary>], iteration_bounds = array<i64: 1, 1>, scalar_prefetch = 0 : i64, scratch_operands = 4 : i64, tpu.core_type = #tpu.core_type<tc>, window_params = [{transform_indices = @transform_0, window_bounds = array<i64: 16, 128>}, {transform_indices = @transform_1, window_bounds = array<i64: 16, 128>}, {transform_indices = @transform_2, window_bounds = array<i64: 1, 4, 8, 128>}]} {
    %c0_i32 = arith.constant 0 : i32
    %0 = arith.cmpi eq, %arg1, %c0_i32 : i32
    %1 = arith.extui %0 : i1 to i32
    %c0_i32_0 = arith.constant 0 : i32
    %2 = arith.cmpi ne, %1, %c0_i32_0 : i32
    scf.if %2 {
      %cst_28 = arith.constant 0.000000e+00 : f32
      %40 = vector.broadcast %cst_28 : f32 to vector<8x128xf32>
      %c0_29 = arith.constant 0 : index
      %c0_30 = arith.constant 0 : index
      %41 = vector.load %arg5[%c0_29, %c0_30] : memref<8x128xf32, #tpu.memory_space<vmem>>, vector<8x128xf32>
      tpu.vector_store %arg5[%c0_29, %c0_30], %40 {strides = array<i32>} : memref<8x128xf32, #tpu.memory_space<vmem>>, vector<8x128xf32>,
      %cst_31 = arith.constant 0.000000e+00 : f32
      %42 = vector.broadcast %cst_31 : f32 to vector<8x128xf32>
      %c0_32 = arith.constant 0 : index
      %c0_33 = arith.constant 0 : index
      %43 = vector.load %arg6[%c0_32, %c0_33] : memref<8x128xf32, #tpu.memory_space<vmem>>, vector<8x128xf32>
      tpu.vector_store %arg6[%c0_32, %c0_33], %42 {strides = array<i32>} : memref<8x128xf32, #tpu.memory_space<vmem>>, vector<8x128xf32>,
      %cst_34 = arith.constant 0.000000e+00 : f32
      %44 = vector.broadcast %cst_34 : f32 to vector<8x128xf32>
      %c0_35 = arith.constant 0 : index
      %c0_36 = arith.constant 0 : index
      %45 = vector.load %arg7[%c0_35, %c0_36] : memref<8x128xf32, #tpu.memory_space<vmem>>, vector<8x128xf32>
      tpu.vector_store %arg7[%c0_35, %c0_36], %44 {strides = array<i32>} : memref<8x128xf32, #tpu.memory_space<vmem>>, vector<8x128xf32>,
      %cst_37 = arith.constant 0.000000e+00 : f32
      %46 = vector.broadcast %cst_37 : f32 to vector<8x128xf32>
      %c0_38 = arith.constant 0 : index
      %c0_39 = arith.constant 0 : index
      %47 = vector.load %arg8[%c0_38, %c0_39] : memref<8x128xf32, #tpu.memory_space<vmem>>, vector<8x128xf32>
      tpu.vector_store %arg8[%c0_38, %c0_39], %46 {strides = array<i32>} : memref<8x128xf32, #tpu.memory_space<vmem>>, vector<8x128xf32>,
    } else {
    }
    %c0 = arith.constant 0 : index
    %c0_1 = arith.constant 0 : index
    %3 = vector.load %arg2[%c0, %c0_1] : memref<16x128xf32, #tpu.memory_space<vmem>>, vector<16x128xf32>
    %c0_2 = arith.constant 0 : index
    %c0_3 = arith.constant 0 : index
    %4 = vector.load %arg3[%c0_2, %c0_3] : memref<16x128xf32, #tpu.memory_space<vmem>>, vector<16x128xf32>
    %5 = math.log %3 : vector<16x128xf32>
    %cst = arith.constant -1.000000e+02 : f32
    %6 = vector.broadcast %cst : f32 to vector<16x128xf32>
    %7 = arith.maximumf %5, %6 : vector<16x128xf32>
    %cst_4 = arith.constant 1.000000e+00 : f32
    %8 = vector.broadcast %cst_4 : f32 to vector<16x128xf32>
    %9 = arith.subf %8, %3 : vector<16x128xf32>
    %10 = math.log %9 : vector<16x128xf32>
    %cst_5 = arith.constant -1.000000e+02 : f32
    %11 = vector.broadcast %cst_5 : f32 to vector<16x128xf32>
    %12 = arith.maximumf %10, %11 : vector<16x128xf32>
    %13 = arith.subf %7, %12 : vector<16x128xf32>
    %14 = arith.mulf %4, %13 : vector<16x128xf32>
    %15 = arith.addf %14, %12 : vector<16x128xf32>
    %c0_6 = arith.constant 0 : index
    %c0_7 = arith.constant 0 : index
    %16 = vector.load %arg5[%c0_6, %c0_7] : memref<8x128xf32, #tpu.memory_space<vmem>>, vector<8x128xf32>
    %17 = vector.shape_cast %15 : vector<16x128xf32> to vector<2x8x128xf32>
    %cst_8 = arith.constant dense<0.000000e+00> : vector<8x128xf32>
    %18 = vector.multi_reduction <add>, %17, %cst_8 [0] : vector<2x8x128xf32> to vector<8x128xf32>
    %19 = arith.addf %16, %18 : vector<8x128xf32>
    %c0_9 = arith.constant 0 : index
    %c0_10 = arith.constant 0 : index
    %20 = vector.load %arg5[%c0_9, %c0_10] : memref<8x128xf32, #tpu.memory_space<vmem>>, vector<8x128xf32>
    tpu.vector_store %arg5[%c0_9, %c0_10], %19 {strides = array<i32>} : memref<8x128xf32, #tpu.memory_space<vmem>>, vector<8x128xf32>,
    %c0_11 = arith.constant 0 : index
    %c0_12 = arith.constant 0 : index
    %21 = vector.load %arg6[%c0_11, %c0_12] : memref<8x128xf32, #tpu.memory_space<vmem>>, vector<8x128xf32>
    %22 = arith.mulf %3, %4 : vector<16x128xf32>
    %23 = vector.shape_cast %22 : vector<16x128xf32> to vector<2x8x128xf32>
    %cst_13 = arith.constant dense<0.000000e+00> : vector<8x128xf32>
    %24 = vector.multi_reduction <add>, %23, %cst_13 [0] : vector<2x8x128xf32> to vector<8x128xf32>
    %25 = arith.addf %21, %24 : vector<8x128xf32>
    %c0_14 = arith.constant 0 : index
    %c0_15 = arith.constant 0 : index
    %26 = vector.load %arg6[%c0_14, %c0_15] : memref<8x128xf32, #tpu.memory_space<vmem>>, vector<8x128xf32>
    tpu.vector_store %arg6[%c0_14, %c0_15], %25 {strides = array<i32>} : memref<8x128xf32, #tpu.memory_space<vmem>>, vector<8x128xf32>,
    %c0_16 = arith.constant 0 : index
    %c0_17 = arith.constant 0 : index
    %27 = vector.load %arg7[%c0_16, %c0_17] : memref<8x128xf32, #tpu.memory_space<vmem>>, vector<8x128xf32>
    %28 = vector.shape_cast %3 : vector<16x128xf32> to vector<2x8x128xf32>
    %cst_18 = arith.constant dense<0.000000e+00> : vector<8x128xf32>
    %29 = vector.multi_reduction <add>, %28, %cst_18 [0] : vector<2x8x128xf32> to vector<8x128xf32>
    %30 = arith.addf %27, %29 : vector<8x128xf32>
    %c0_19 = arith.constant 0 : index
    %c0_20 = arith.constant 0 : index
    %31 = vector.load %arg7[%c0_19, %c0_20] : memref<8x128xf32, #tpu.memory_space<vmem>>, vector<8x128xf32>
    tpu.vector_store %arg7[%c0_19, %c0_20], %30 {strides = array<i32>} : memref<8x128xf32, #tpu.memory_space<vmem>>, vector<8x128xf32>,
    %c0_21 = arith.constant 0 : index
    %c0_22 = arith.constant 0 : index
    %32 = vector.load %arg8[%c0_21, %c0_22] : memref<8x128xf32, #tpu.memory_space<vmem>>, vector<8x128xf32>
    %33 = vector.shape_cast %4 : vector<16x128xf32> to vector<2x8x128xf32>
    %cst_23 = arith.constant dense<0.000000e+00> : vector<8x128xf32>
    %34 = vector.multi_reduction <add>, %33, %cst_23 [0] : vector<2x8x128xf32> to vector<8x128xf32>
    %35 = arith.addf %32, %34 : vector<8x128xf32>
    %c0_24 = arith.constant 0 : index
    %c0_25 = arith.constant 0 : index
    %36 = vector.load %arg8[%c0_24, %c0_25] : memref<8x128xf32, #tpu.memory_space<vmem>>, vector<8x128xf32>
    tpu.vector_store %arg8[%c0_24, %c0_25], %35 {strides = array<i32>} : memref<8x128xf32, #tpu.memory_space<vmem>>, vector<8x128xf32>,
    %c0_i32_26 = arith.constant 0 : i32
    %37 = arith.cmpi eq, %arg1, %c0_i32_26 : i32
    %38 = arith.extui %37 : i1 to i32
    %c0_i32_27 = arith.constant 0 : i32
    %39 = arith.cmpi ne, %38, %c0_i32_27 : i32
    scf.if %39 {
      %c0_28 = arith.constant 0 : index
      %c0_29 = arith.constant 0 : index
      %40 = vector.load %arg5[%c0_28, %c0_29] : memref<8x128xf32, #tpu.memory_space<vmem>>, vector<8x128xf32>
      %c0_30 = arith.constant 0 : index
      %c0_31 = arith.constant 0 : index
      %c0_32 = arith.constant 0 : index
      %c0_33 = arith.constant 0 : index
      %41 = vector.load %arg4[%c0_30, %c0_31, %c0_32, %c0_33] : memref<1x4x8x128xf32, #tpu.memory_space<vmem>>, vector<1x1x8x128xf32>
      %42 = vector.shape_cast %41 : vector<1x1x8x128xf32> to vector<8x128xf32>
      %43 = vector.shape_cast %40 : vector<8x128xf32> to vector<1x1x8x128xf32>
      tpu.vector_store %arg4[%c0_30, %c0_31, %c0_32, %c0_33], %43 {strides = array<i32>} : memref<1x4x8x128xf32, #tpu.memory_space<vmem>>, vector<1x1x8x128xf32>,
      %c0_34 = arith.constant 0 : index
      %c0_35 = arith.constant 0 : index
      %44 = vector.load %arg6[%c0_34, %c0_35] : memref<8x128xf32, #tpu.memory_space<vmem>>, vector<8x128xf32>
      %c0_36 = arith.constant 0 : index
      %c1 = arith.constant 1 : index
      %c0_37 = arith.constant 0 : index
      %c0_38 = arith.constant 0 : index
      %45 = vector.load %arg4[%c0_36, %c1, %c0_37, %c0_38] : memref<1x4x8x128xf32, #tpu.memory_space<vmem>>, vector<1x1x8x128xf32>
      %46 = vector.shape_cast %45 : vector<1x1x8x128xf32> to vector<8x128xf32>
      %47 = vector.shape_cast %44 : vector<8x128xf32> to vector<1x1x8x128xf32>
      tpu.vector_store %arg4[%c0_36, %c1, %c0_37, %c0_38], %47 {strides = array<i32>} : memref<1x4x8x128xf32, #tpu.memory_space<vmem>>, vector<1x1x8x128xf32>,
      %c0_39 = arith.constant 0 : index
      %c0_40 = arith.constant 0 : index
      %48 = vector.load %arg7[%c0_39, %c0_40] : memref<8x128xf32, #tpu.memory_space<vmem>>, vector<8x128xf32>
      %c0_41 = arith.constant 0 : index
      %c2 = arith.constant 2 : index
      %c0_42 = arith.constant 0 : index
      %c0_43 = arith.constant 0 : index
      %49 = vector.load %arg4[%c0_41, %c2, %c0_42, %c0_43] : memref<1x4x8x128xf32, #tpu.memory_space<vmem>>, vector<1x1x8x128xf32>
      %50 = vector.shape_cast %49 : vector<1x1x8x128xf32> to vector<8x128xf32>
      %51 = vector.shape_cast %48 : vector<8x128xf32> to vector<1x1x8x128xf32>
      tpu.vector_store %arg4[%c0_41, %c2, %c0_42, %c0_43], %51 {strides = array<i32>} : memref<1x4x8x128xf32, #tpu.memory_space<vmem>>, vector<1x1x8x128xf32>,
      %c0_44 = arith.constant 0 : index
      %c0_45 = arith.constant 0 : index
      %52 = vector.load %arg8[%c0_44, %c0_45] : memref<8x128xf32, #tpu.memory_space<vmem>>, vector<8x128xf32>
      %c0_46 = arith.constant 0 : index
      %c3 = arith.constant 3 : index
      %c0_47 = arith.constant 0 : index
      %c0_48 = arith.constant 0 : index
      %53 = vector.load %arg4[%c0_46, %c3, %c0_47, %c0_48] : memref<1x4x8x128xf32, #tpu.memory_space<vmem>>, vector<1x1x8x128xf32>
      %54 = vector.shape_cast %53 : vector<1x1x8x128xf32> to vector<8x128xf32>
      %55 = vector.shape_cast %52 : vector<8x128xf32> to vector<1x1x8x128xf32>
      tpu.vector_store %arg4[%c0_46, %c3, %c0_47, %c0_48], %55 {strides = array<i32>} : memref<1x4x8x128xf32, #tpu.memory_space<vmem>>, vector<1x1x8x128xf32>,
    } else {
    }
    return
  }
  func.func @transform_0(%arg0: i32, %arg1: i32) -> (i32, i32) {
    %c1_i32 = arith.constant 1 : i32
    %0 = arith.muli %arg0, %c1_i32 : i32
    %1 = arith.addi %0, %arg1 : i32
    %c0_i32 = arith.constant 0 : i32
    %2 = arith.minsi %1, %c0_i32 : i32
    %c0_i32_0 = arith.constant 0 : i32
    %c0_i32_1 = arith.constant 0 : i32
    return %2, %c0_i32_0 : i32, i32
  }
  func.func @transform_1(%arg0: i32, %arg1: i32) -> (i32, i32) {
    %c1_i32 = arith.constant 1 : i32
    %0 = arith.muli %arg0, %c1_i32 : i32
    %1 = arith.addi %0, %arg1 : i32
    %c0_i32 = arith.constant 0 : i32
    %2 = arith.minsi %1, %c0_i32 : i32
    %c0_i32_0 = arith.constant 0 : i32
    %c0_i32_1 = arith.constant 0 : i32
    return %2, %c0_i32_0 : i32, i32
  }
  func.func @transform_2(%arg0: i32, %arg1: i32) -> (i32, i32, i32, i32) {
    %c0_i32 = arith.constant 0 : i32
    %c0_i32_0 = arith.constant 0 : i32
    %c0_i32_1 = arith.constant 0 : i32
    %c0_i32_2 = arith.constant 0 : i32
    return %arg0, %c0_i32, %c0_i32_0, %c0_i32_1 : i32, i32, i32, i32
  }
}

</mosaic_0001>

<llo_original>
// kernel: dice_bce_loss.1
$region0: #{dice_bce_loss.1}
  #allocation0 [shape = 'u32[]', space=smem, size = 0x4, offset = 0x4, fixed_abs, tag = 'smem constant byte address 0x4 - core index']
  #allocation1 [shape = 'u32[144,128]{1,0:T(1,128)}', space=vmem, size = 0x12000, scoped, tag = 'internal scratch']
  #allocation2 [shape = 'f32[8,128]{1,0:T(8,128)}', space=vmem, size = 0x1000, scoped, tag = 'scratch operand']
  #allocation3 [shape = 'f32[8,128]{1,0:T(8,128)}', space=vmem, size = 0x1000, scoped, tag = 'scratch operand']
  #allocation4 [shape = 'f32[8,128]{1,0:T(8,128)}', space=vmem, size = 0x1000, scoped, tag = 'scratch operand']
  #allocation5 [shape = 'f32[8,128]{1,0:T(8,128)}', space=vmem, size = 0x1000, scoped, tag = 'scratch operand']
  %s0 = inlined_call_operand.vmem [shape: f32[16,128], index: 0, kind: input, shape index: {}]
  %s1 = inlined_call_operand.vmem [shape: f32[16,128], index: 1, kind: input, shape index: {}]
  %s2 = inlined_call_operand.vmem [shape: f32[1,4,8,128], index: 2, kind: output, shape index: {}]
  %s3 = sld [smem:[#allocation0]]
  $region26: #{dice_bce_loss.1} parent=0
    _
  %s5 = ssub.s32 1, %s3
  %s6 = scalar_select 0, %s5, %s3
  // Predicated region
  $region2: #{dice_bce_loss.1} parent=0 // pred_check
    _
  $region3: #{dice_bce_loss.1} parent=0 // pred_check_branch
    %8 = sbr.rel (0) target = $region5
  $region4: #{dice_bce_loss.1} parent=0 // pred_region
    %s9 = sadd.s32 0, 0
    %p10 = scmp.lt.s32.totalorder %s9, 0
    %s11 = scalar_select %p10, %s9, 0
    %s12 = smul.u32 2, %s11
    %p13 = scmp.lt.s32.totalorder %s12, 1
    %s14 = scalar_select %p13, %s12, 1
    %s15 = smul.addr %s14, 8
    %s16 = scalar_lea.vmem %s0, %s15
    %s17 = sadd.s32 0, 0
    %p18 = scmp.lt.s32.totalorder %s17, 0
    %s19 = scalar_select %p18, %s17, 0
    %s20 = smul.u32 2, %s19
  $region5: #{dice_bce_loss.1} parent=0 // pred_fallthru
    _
  // Predicated region
  $region6: #{dice_bce_loss.1} parent=0 // pred_check
    _
  $region7: #{dice_bce_loss.1} parent=0 // pred_check_branch
    %22 = sbr.rel (0) target = $region9
  $region8: #{dice_bce_loss.1} parent=0 // pred_region
    %s23 = sadd.s32 0, 0
    %p24 = scmp.lt.s32.totalorder %s23, 0
    %s25 = scalar_select %p24, %s23, 0
    %s26 = smul.u32 2, %s25
    %p27 = scmp.lt.s32.totalorder %s26, 1
    %s28 = scalar_select %p27, %s26, 1
    %s29 = smul.addr %s28, 8
    %s30 = scalar_lea.vmem %s1, %s29
    %s31 = sadd.s32 0, 0
    %p32 = scmp.lt.s32.totalorder %s31, 0
    %s33 = scalar_select %p32, %s31, 0
    %s34 = smul.u32 2, %s33
  $region9: #{dice_bce_loss.1} parent=0 // pred_fallthru
    _
  %s35 = sadd.s32 0, 0
  %p36 = scmp.lt.s32.totalorder %s35, 0
  %s37 = scalar_select %p36, %s35, 0
  %s38 = smul.u32 2, %s37
  %p39 = scmp.lt.s32.totalorder %s38, 1
  %s40 = scalar_select %p39, %s38, 1
  %s41 = smul.addr %s40, 8
  %s42 = scalar_lea.vmem %s0, %s41
  %s43 = sadd.s32 0, 0
  %p44 = scmp.lt.s32.totalorder %s43, 0
  %s45 = scalar_select %p44, %s43, 0
  %s46 = smul.u32 2, %s45
  %p47 = scmp.lt.s32.totalorder %s46, 1
  %s48 = scalar_select %p47, %s46, 1
  %s49 = smul.addr %s48, 8
  %s50 = scalar_lea.vmem %s1, %s49
  %s51 = sadd.s32 0, 0
  %p52 = scmp.lt.s32.totalorder %s51, 0
  %s53 = scalar_select %p52, %s51, 0
  %s54 = smul.u32 2, %s53
  %p55 = scmp.lt.s32.totalorder %s54, 1
  %s56 = scalar_select %p55, %s54, 1
  %s57 = smul.addr %s56, 8
  %s58 = scalar_lea.vmem %s0, %s57
  %s59 = sadd.s32 0, 0
  %p60 = scmp.lt.s32.totalorder %s59, 0
  %s61 = scalar_select %p60, %s59, 0
  %s62 = smul.u32 2, %s61
  %s63 = sadd.s32 0, 0
  %p64 = scmp.lt.s32.totalorder %s63, 0
  %s65 = scalar_select %p64, %s63, 0
  %s66 = smul.u32 2, %s65
  %p67 = scmp.lt.s32.totalorder %s66, 1
  %s68 = scalar_select %p67, %s66, 1
  %s69 = smul.addr %s68, 8
  %s70 = scalar_lea.vmem %s1, %s69
  %s71 = sadd.s32 0, 0
  %p72 = scmp.lt.s32.totalorder %s71, 0
  %s73 = scalar_select %p72, %s71, 0
  %s74 = smul.u32 2, %s73
  %p75 = scmp.eq.s32.totalorder 0, 0
  // Predicated region
  $region10: #{dice_bce_loss.1} parent=0 // pred_check
    %p76 = pneg %p75
  $region11: #{dice_bce_loss.1} parent=0 // pred_check_branch
    %78 = sbr.rel (%p76) target = $region13
  $region12: #{dice_bce_loss.1} parent=0 // pred_region
    %79 = vst [vmem:[#allocation2] sm:$0xff] 0.0
    %80 = vst [vmem:[#allocation3] sm:$0xff] 0.0
    %81 = vst [vmem:[#allocation4] sm:$0xff] 0.0
    %82 = vst [vmem:[#allocation5] sm:$0xff] 0.0
  $region13: #{dice_bce_loss.1} parent=0 // pred_fallthru
    _
  %v83 = vld [vmem:[%s58] sm:$0xff]
  %v84 = vld [vmem:[%s58 + $0x8] sm:$0xff]
  %v85 = vld [vmem:[%s70] sm:$0xff]
  %v86 = vld [vmem:[%s70 + $0x8] sm:$0xff]
  %v87 = vlog2.pop %v83
  %v88 = vmul.f32 %v87, 0.6931472
  %v89 = vlog2.pop %v84
  %v90 = vmul.f32 %v89, 0.6931472
  %v91 = vmax.f32 %v88, -100.0
  %v92 = vmax.f32 %v90, -100.0
  %v93 = vsub.f32 1.0, %v83
  %v94 = vsub.f32 1.0, %v84
  %v95 = vlog2.pop %v93
  %v96 = vmul.f32 %v95, 0.6931472
  %v97 = vlog2.pop %v94
  %v98 = vmul.f32 %v97, 0.6931472
  %v99 = vmax.f32 %v96, -100.0
  %v100 = vmax.f32 %v98, -100.0
  %v101 = vsub.f32 %v91, %v99
  %v102 = vsub.f32 %v92, %v100
  %v103 = vmul.f32 %v85, %v101
  %v104 = vmul.f32 %v86, %v102
  %v105 = vadd.f32 %v103, %v99
  %v106 = vadd.f32 %v104, %v100
  %v107 = vld [vmem:[#allocation2] sm:$0xff]
  %v108 = vadd.f32 %v105, %v106
  %v109 = vadd.f32 %v107, %v108
  %110 = vst [vmem:[#allocation2] sm:$0xff] %v109
  %v111 = vld [vmem:[#allocation3] sm:$0xff]
  %v112 = vmul.f32 %v83, %v85
  %v113 = vmul.f32 %v84, %v86
  %v114 = vadd.f32 %v112, %v113
  %v115 = vadd.f32 %v111, %v114
  %116 = vst [vmem:[#allocation3] sm:$0xff] %v115
  %v117 = vld [vmem:[#allocation4] sm:$0xff]
  %v118 = vadd.f32 %v83, %v84
  %v119 = vadd.f32 %v117, %v118
  %120 = vst [vmem:[#allocation4] sm:$0xff] %v119
  %v121 = vld [vmem:[#allocation5] sm:$0xff]
  %v122 = vadd.f32 %v85, %v86
  %v123 = vadd.f32 %v121, %v122
  %124 = vst [vmem:[#allocation5] sm:$0xff] %v123
  // Predicated region
  $region14: #{dice_bce_loss.1} parent=0 // pred_check
    %p125 = pneg %p75
  $region15: #{dice_bce_loss.1} parent=0 // pred_check_branch
    %127 = sbr.rel (%p125) target = $region17
  $region16: #{dice_bce_loss.1} parent=0 // pred_region
    %v128 = vld [vmem:[#allocation2] sm:$0xff]
    %129 = vst [vmem:[%s2] sm:$0xff] %v128
    %v130 = vld [vmem:[#allocation3] sm:$0xff]
    %s131 = scalar_lea.vmem %s2, 8
    %132 = vst [vmem:[%s131] sm:$0xff] %v130
    %v133 = vld [vmem:[#allocation4] sm:$0xff]
    %s134 = scalar_lea.vmem %s2, 16
    %135 = vst [vmem:[%s134] sm:$0xff] %v133
    %v136 = vld [vmem:[#allocation5] sm:$0xff]
    %s137 = scalar_lea.vmem %s2, 24
    %138 = vst [vmem:[%s137] sm:$0xff] %v136
  $region17: #{dice_bce_loss.1} parent=0 // pred_fallthru
    _
  // Predicated region
  $region18: #{dice_bce_loss.1} parent=0 // pred_check
    _
  $region19: #{dice_bce_loss.1} parent=0 // pred_check_branch
    %140 = sbr.rel (0) target = $region21
  $region20: #{dice_bce_loss.1} parent=0 // pred_region
    _
  $region21: #{dice_bce_loss.1} parent=0 // pred_fallthru
    _
  // Predicated region
  $region22: #{dice_bce_loss.1} parent=0 // pred_check
    _
  $region23: #{dice_bce_loss.1} parent=0 // pred_check_branch
    %142 = sbr.rel (0) target = $region25
  $region24: #{dice_bce_loss.1} parent=0 // pred_region
    _
  $region25: #{dice_bce_loss.1} parent=0 // pred_fallthru
    _

</llo_original>
